<compile_context>
chip_gen: v7x
topology: tpu7x:2x2x1
jax: 0.10.0
libtpu: 0.0.40
codegen_flags: <defaults>
</compile_context>

<pallas_src>
import functools

import jax
import jax.numpy as jnp
from jax.experimental import pallas as pl
from jax.experimental.pallas import tpu as pltpu


# ----------------------------------------------------------------------------
# Pallas kernel: (optional dropout) + linear head
# ----------------------------------------------------------------------------
def _head_kernel(*refs, apply_mask):
    """refs = (h, [mask,] w, b, o); h:[TB,D] mask:[TB,D] w:[D,TN] b:[1,TN] o:[TB,TN]."""
    if apply_mask:
        h_ref, m_ref, w_ref, b_ref, o_ref = refs
        # Mask arrives pre-scaled (0 or 1/(1-p)): one f32 VPU multiply
        # (v5e has no bf16 VPU), then cast down to the MXU-native dtype.
        h = h_ref[...].astype(jnp.float32) * m_ref[...].astype(jnp.float32)
    else:
        h_ref, w_ref, b_ref, o_ref = refs
        h = h_ref[...].astype(jnp.float32)

    acc = jnp.dot(h.astype(w_ref.dtype), w_ref[...],
                  preferred_element_type=jnp.float32)
    o_ref[...] = (acc + b_ref[...].astype(jnp.float32)).astype(o_ref.dtype)


# ----------------------------------------------------------------------------
# One-time parameter preparation (hoisted out of the per-call path)
# ----------------------------------------------------------------------------
def init_linear_head(w, b, param_dtype=jnp.bfloat16):
    """Pad the class dim to a multiple of 128 ONCE and store W in bf16.

    w: [input_dim, class_num]  (PyTorch weight.T)   b: [class_num]
    Returns (w_pad [D, Np] bf16, b_pad [1, Np] f32).
    """
    D, N = w.shape
    assert b.shape == (N,)
    n_pad = pl.cdiv(N, 128) * 128
    w_pad = jnp.zeros((D, n_pad), param_dtype).at[:, :N].set(w.astype(param_dtype))
    b_pad = jnp.zeros((1, n_pad), jnp.float32).at[0, :N].set(b.astype(jnp.float32))
    return w_pad, b_pad


def dropout_mask(key, shape, p, dtype=jnp.float32):
    """Pre-scaled inverted-dropout mask: 0 with prob p, else 1/(1-p)."""
    if p <= 0.0:
        return None
    if p >= 1.0:  # torch.nn.Dropout(p=1.0) zeroes everything
        return jnp.zeros(shape, dtype)
    keep = jax.random.bernoulli(key, 1.0 - p, shape)
    return jnp.where(keep, jnp.asarray(1.0 / (1.0 - p), dtype),
                     jnp.asarray(0.0, dtype))


# ----------------------------------------------------------------------------
# Pallas-call wrapper
# ----------------------------------------------------------------------------
def _pick_batch_tiling(B):
    if B <= 128:
        return B, B                      # block == full extent (always legal)
    tile = 128
    return pl.cdiv(B, tile) * tile, tile


def linear_pred(h, w_pad, b_pad, drop_mask=None):
    """Dropout + Linear head in one Pallas call.

    h: [B, D]; w_pad: [D, Np] (Np % 128 == 0, ideally bf16); b_pad: [1, Np];
    drop_mask: [B, D] pre-scaled mask or None.  Returns padded logits [B, Np] f32.
    """
    B, D = h.shape
    Dw, Np = w_pad.shape
    assert Dw == D and b_pad.shape == (1, Np) and Np % 128 == 0

    b_total, tile_b = _pick_batch_tiling(B)
    if b_total != B:
        pad = b_total - B
        h = jnp.pad(h, ((0, pad), (0, 0)))
        if drop_mask is not None:
            drop_mask = jnp.pad(drop_mask, ((0, pad), (0, 0)))

    tile_n = 256 if Np % 256 == 0 else 128
    grid = (b_total // tile_b, Np // tile_n)

    in_specs = [pl.BlockSpec((tile_b, D), lambda i, j: (i, 0))]     # h
    args = [h]
    if drop_mask is not None:
        in_specs.append(pl.BlockSpec((tile_b, D), lambda i, j: (i, 0)))
        args.append(drop_mask)
    in_specs += [
        pl.BlockSpec((D, tile_n), lambda i, j: (0, j)),             # W tile
        pl.BlockSpec((1, tile_n), lambda i, j: (0, j)),             # bias tile
    ]
    args += [w_pad, b_pad]

    # NOTE: if input_dim / class_num grow large, cap tile_n (256-512) and set
    # vmem_limit_bytes explicitly so 2x double-buffered W tiles fit v7x's
    # 64 MiB VMEM.  Current tiles are far below any limit.
    out = pl.pallas_call(
        functools.partial(_head_kernel, apply_mask=drop_mask is not None),
        out_shape=jax.ShapeDtypeStruct((b_total, Np), jnp.float32),
        grid=grid,
        in_specs=in_specs,
        out_specs=pl.BlockSpec((tile_b, tile_n), lambda i, j: (i, j)),
        compiler_params=pltpu.CompilerParams(
            dimension_semantics=("parallel", "parallel")),
    )(*args)
    return out[:B]


# ----------------------------------------------------------------------------
# Stand-in frozen encoder (plain-JAX glue)
# ----------------------------------------------------------------------------
# TODO(synk): the real encoder is an arbitrary frozen external module passed
# into Linear_Eval; a deterministic stand-in (global average pool over T,H,W
# + fixed projection to input_dim) is used as plain-JAX glue outside the kernel.
def encoder_get_representation(block, proj):
    pooled = jnp.mean(block, axis=(2, 3, 4))          # [B, C]  (block is NCTHW)
    return pooled @ proj                              # [B, input_dim]


# ----------------------------------------------------------------------------
# Module forward
# ----------------------------------------------------------------------------
@functools.partial(jax.jit, static_argnames=("class_num", "p", "training"))
def linear_eval_forward(block, proj, w_pad, b_pad, rng_key, *,
                        class_num, p=0.2, training=True):
    # `with torch.no_grad(): h = encoder.get_representation(block)`
    h = jax.lax.stop_gradient(encoder_get_representation(block, proj))
    mask = dropout_mask(rng_key, h.shape, p) if training else None
    logits = linear_pred(h, w_pad, b_pad, drop_mask=mask)
    # Slice off lane padding to match nn.Linear(input_dim, class_num).
    # TODO(synk): drop this slice if downstream consumes the 128-padded logits.
    return logits[:, :class_num]


if __name__ == "__main__":
    # Small, deterministic shapes consistent with the module (batch bumped to a
    # sublane-friendly 16 so the MXU M dimension isn't ~99% idle).
    B, C, T, H, W = 16, 4, 4, 8, 8          # video block, NCTHW
    input_dim, class_num, p = 512, 101, 0.2

    key = jax.random.PRNGKey(0)
    k_block, k_proj, k_w, k_b, k_drop = jax.random.split(key, 5)

    block = jax.random.normal(k_block, (B, C, T, H, W), dtype=jnp.float32)
    proj = jax.random.normal(k_proj, (C, input_dim), dtype=jnp.float32) * 0.1
    # nn.Linear(input_dim, class_num): weight [class_num, input_dim]; store W.T
    w = jax.random.normal(k_w, (input_dim, class_num), dtype=jnp.float32) * 0.02
    b = jax.random.normal(k_b, (class_num,), dtype=jnp.float32) * 0.01

    # One-time head preparation (padding + bf16 cast) -- hoisted out of forward.
    w_pad, b_pad = init_linear_head(w, b)

    # Default module state: encoder.eval() only -> dropout head in training mode.
    out = linear_eval_forward(block, proj, w_pad, b_pad, k_drop,
                              class_num=class_num, p=p, training=True)
    out = jax.block_until_ready(out)
    assert out.shape == (B, class_num), out.shape
    assert bool(jnp.all(jnp.isfinite(out)))

    # Eval-mode head (dropout = identity) + numeric cross-check vs. plain JAX.
    out_eval = jax.block_until_ready(
        linear_eval_forward(block, proj, w_pad, b_pad, k_drop,
                            class_num=class_num, p=p, training=False))
    assert out_eval.shape == (B, class_num)

    h_ref = encoder_get_representation(block, proj)
    ref = (h_ref.astype(jnp.bfloat16).astype(jnp.float32)
           @ w_pad[:, :class_num].astype(jnp.float32)) + b_pad[0, :class_num]
    assert bool(jnp.allclose(out_eval, ref, atol=5e-3, rtol=5e-2)), (
        float(jnp.max(jnp.abs(out_eval - ref))))

    print("KERNEL_OK")
</pallas_src>

<mosaic_0001>
module attributes {stable_mosaic.version = 11 : i64} {
  func.func @_head_kernel(%arg0: i32, %arg1: i32, %arg2: memref<16x512xf32, #tpu.memory_space<vmem>>, %arg3: memref<16x512xf32, #tpu.memory_space<vmem>>, %arg4: memref<512x128xbf16, #tpu.memory_space<vmem>>, %arg5: memref<1x128xf32, #tpu.memory_space<vmem>>, %arg6: memref<16x128xf32, #tpu.memory_space<vmem>>) attributes {dimension_semantics = [#tpu.dimension_semantics<parallel>, #tpu.dimension_semantics<parallel>], iteration_bounds = array<i64: 1, 1>, scalar_prefetch = 0 : i64, scratch_operands = 0 : i64, tpu.core_type = #tpu.core_type<tc>, window_params = [{transform_indices = @transform_0, window_bounds = array<i64: 16, 512>}, {transform_indices = @transform_1, window_bounds = array<i64: 16, 512>}, {transform_indices = @transform_2, window_bounds = array<i64: 512, 128>}, {transform_indices = @transform_3, window_bounds = array<i64: 1, 128>}, {transform_indices = @transform_4, window_bounds = array<i64: 16, 128>}]} {
    %c0 = arith.constant 0 : index
    %c0_0 = arith.constant 0 : index
    %0 = vector.load %arg2[%c0, %c0_0] : memref<16x512xf32, #tpu.memory_space<vmem>>, vector<16x512xf32>
    %c0_1 = arith.constant 0 : index
    %c0_2 = arith.constant 0 : index
    %1 = vector.load %arg3[%c0_1, %c0_2] : memref<16x512xf32, #tpu.memory_space<vmem>>, vector<16x512xf32>
    %2 = arith.mulf %0, %1 : vector<16x512xf32>
    %3 = arith.truncf %2 : vector<16x512xf32> to vector<16x512xbf16>
    %c0_3 = arith.constant 0 : index
    %c0_4 = arith.constant 0 : index
    %4 = vector.load %arg4[%c0_3, %c0_4] : memref<512x128xbf16, #tpu.memory_space<vmem>>, vector<512x128xbf16>
    %cst = arith.constant dense<0.000000e+00> : vector<16x128xf32>
    %5 = tpu.matmul %3, %4, %cst {dimension_numbers = #tpu.dot_dimension_numbers<[1], [0], [0], [1], [0, 0, 1, 1], [], []>} : vector<16x512xbf16>, vector<512x128xbf16>, vector<16x128xf32> -> vector<16x128xf32>
    %c0_5 = arith.constant 0 : index
    %c0_6 = arith.constant 0 : index
    %6 = vector.load %arg5[%c0_5, %c0_6] : memref<1x128xf32, #tpu.memory_space<vmem>>, vector<1x128xf32>
    %7 = vector.broadcast %6 : vector<1x128xf32> to vector<16x128xf32>
    %8 = arith.addf %5, %7 : vector<16x128xf32>
    %c0_7 = arith.constant 0 : index
    %c0_8 = arith.constant 0 : index
    %9 = vector.load %arg6[%c0_7, %c0_8] : memref<16x128xf32, #tpu.memory_space<vmem>>, vector<16x128xf32>
    tpu.vector_store %arg6[%c0_7, %c0_8], %8 {strides = array<i32>} : memref<16x128xf32, #tpu.memory_space<vmem>>, vector<16x128xf32>,
    return
  }
  func.func @transform_0(%arg0: i32, %arg1: i32) -> (i32, i32) {
    %c0_i32 = arith.constant 0 : i32
    %c0_i32_0 = arith.constant 0 : i32
    return %arg0, %c0_i32 : i32, i32
  }
  func.func @transform_1(%arg0: i32, %arg1: i32) -> (i32, i32) {
    %c0_i32 = arith.constant 0 : i32
    %c0_i32_0 = arith.constant 0 : i32
    return %arg0, %c0_i32 : i32, i32
  }
  func.func @transform_2(%arg0: i32, %arg1: i32) -> (i32, i32) {
    %c0_i32 = arith.constant 0 : i32
    %c0_i32_0 = arith.constant 0 : i32
    return %c0_i32, %arg1 : i32, i32
  }
  func.func @transform_3(%arg0: i32, %arg1: i32) -> (i32, i32) {
    %c0_i32 = arith.constant 0 : i32
    %c0_i32_0 = arith.constant 0 : i32
    return %c0_i32, %arg1 : i32, i32
  }
  func.func @transform_4(%arg0: i32, %arg1: i32) -> (i32, i32) {
    %c0_i32 = arith.constant 0 : i32
    return %arg0, %arg1 : i32, i32
  }
}

</mosaic_0001>

<llo_original>
// kernel: linear_eval_forward.1
$region0: #{linear_eval_forward.1}
  #allocation0 [shape = 'u32[]', space=smem, size = 0x4, offset = 0x4, fixed_abs, tag = 'smem constant byte address 0x4 - core index']
  #allocation1 [shape = 'u32[144,128]{1,0:T(1,128)}', space=vmem, size = 0x12000, scoped, tag = 'internal scratch']
  %s0 = inlined_call_operand.vmem [shape: f32[16,512], index: 0, kind: input, shape index: {}]
  %s1 = inlined_call_operand.vmem [shape: f32[16,512], index: 1, kind: input, shape index: {}]
  %s2 = inlined_call_operand.vmem [shape: bf16[512,128], index: 2, kind: input, shape index: {}]
  %s3 = inlined_call_operand.vmem [shape: f32[1,128], index: 3, kind: input, shape index: {}]
  %s4 = inlined_call_operand.hbm [shape: f32[16,128], index: 4, kind: output, shape index: {}]
  %s5 = sld [smem:[#allocation0]]
  $region26: #{linear_eval_forward.1} parent=0
    _
  %s7 = ssub.s32 1, %s5
  %s8 = scalar_select 0, %s7, %s5
  $region1: #{linear_eval_forward.1} parent=0
    #allocation2 [shape = 'u8[8192]{0}', space=vmem, size = 0x2000, scoped, tag = 'output window, operand 0, single buffered']
    #allocation3 [shape = 's32[1]{0}', space=sflag, size = 0x4, scoped, tag = 'scoped memory for linear_eval_forward.1']
    %9 = vsyncpa [#allocation3], 0
    // Predicated region
    $region2: #{linear_eval_forward.1} parent=1 // pred_check
      _
    $region3: #{linear_eval_forward.1} parent=1 // pred_check_branch
      %11 = sbr.rel (0) target = $region5
    $region4: #{linear_eval_forward.1} parent=1 // pred_region
      _
    $region5: #{linear_eval_forward.1} parent=1 // pred_fallthru
      _
    // Predicated region
    $region6: #{linear_eval_forward.1} parent=1 // pred_check
      _
    $region7: #{linear_eval_forward.1} parent=1 // pred_check_branch
      %13 = sbr.rel (0) target = $region9
    $region8: #{linear_eval_forward.1} parent=1 // pred_region
      _
    $region9: #{linear_eval_forward.1} parent=1 // pred_fallthru
      _
    // Predicated region
    $region10: #{linear_eval_forward.1} parent=1 // pred_check
      _
    $region11: #{linear_eval_forward.1} parent=1 // pred_check_branch
      %15 = sbr.rel (0) target = $region13
    $region12: #{linear_eval_forward.1} parent=1 // pred_region
      _
    $region13: #{linear_eval_forward.1} parent=1 // pred_fallthru
      _
    // Predicated region
    $region14: #{linear_eval_forward.1} parent=1 // pred_check
      _
    $region15: #{linear_eval_forward.1} parent=1 // pred_check_branch
      %17 = sbr.rel (0) target = $region17
    $region16: #{linear_eval_forward.1} parent=1 // pred_region
      _
    $region17: #{linear_eval_forward.1} parent=1 // pred_fallthru
      _
    %v19 = vld [vmem:[%s0] sm:$0xff]
    %v20 = vld [vmem:[%s0 + $0x8] sm:$0xff]
    %v21 = vld [vmem:[%s0 + $0x10] sm:$0xff]
    %v22 = vld [vmem:[%s0 + $0x18] sm:$0xff]
    %v23 = vld [vmem:[%s0 + $0x20] sm:$0xff]
    %v24 = vld [vmem:[%s0 + $0x28] sm:$0xff]
    %v25 = vld [vmem:[%s0 + $0x30] sm:$0xff]
    %v26 = vld [vmem:[%s0 + $0x38] sm:$0xff]
    %v27 = vld [vmem:[%s1] sm:$0xff]
    %v28 = vld [vmem:[%s1 + $0x8] sm:$0xff]
    %v29 = vld [vmem:[%s1 + $0x10] sm:$0xff]
    %v30 = vld [vmem:[%s1 + $0x18] sm:$0xff]
    %v31 = vld [vmem:[%s1 + $0x20] sm:$0xff]
    %v32 = vld [vmem:[%s1 + $0x28] sm:$0xff]
    %v33 = vld [vmem:[%s1 + $0x30] sm:$0xff]
    %v34 = vld [vmem:[%s1 + $0x38] sm:$0xff]
    %v35 = vmul.f32 %v19, %v27
    %v36 = vmul.f32 %v20, %v28
    %v37 = vmul.f32 %v21, %v29
    %v38 = vmul.f32 %v22, %v30
    %v39 = vmul.f32 %v23, %v31
    %v40 = vmul.f32 %v24, %v32
    %v41 = vmul.f32 %v25, %v33
    %v42 = vmul.f32 %v26, %v34
    %v43 = vpack.c.bf16 %v39, %v35
    %v44 = vpack.c.bf16 %v40, %v36
    %v45 = vpack.c.bf16 %v41, %v37
    %v46 = vpack.c.bf16 %v42, %v38
    %v47 = vld [vmem:[%s2] sm:$0xf]
    %v48 = vld [vmem:[%s2 + $0x4] sm:$0xf]
    %v49 = vld [vmem:[%s2 + $0x8] sm:$0xf]
    %v50 = vld [vmem:[%s2 + $0xc] sm:$0xf]
    %v51 = vld [vmem:[%s2 + $0x10] sm:$0xf]
    %v52 = vld [vmem:[%s2 + $0x14] sm:$0xf]
    %v53 = vld [vmem:[%s2 + $0x18] sm:$0xf]
    %v54 = vld [vmem:[%s2 + $0x1c] sm:$0xf]
    %v55 = vld [vmem:[%s2 + $0x20] sm:$0xf]
    %v56 = vld [vmem:[%s2 + $0x24] sm:$0xf]
    %v57 = vld [vmem:[%s2 + $0x28] sm:$0xf]
    %v58 = vld [vmem:[%s2 + $0x2c] sm:$0xf]
    %v59 = vld [vmem:[%s2 + $0x30] sm:$0xf]
    %v60 = vld [vmem:[%s2 + $0x34] sm:$0xf]
    %v61 = vld [vmem:[%s2 + $0x38] sm:$0xf]
    %v62 = vld [vmem:[%s2 + $0x3c] sm:$0xf]
    %v63 = vld [vmem:[%s2 + $0x40] sm:$0xf]
    %v64 = vld [vmem:[%s2 + $0x44] sm:$0xf]
    %v65 = vld [vmem:[%s2 + $0x48] sm:$0xf]
    %v66 = vld [vmem:[%s2 + $0x4c] sm:$0xf]
    %v67 = vld [vmem:[%s2 + $0x50] sm:$0xf]
    %v68 = vld [vmem:[%s2 + $0x54] sm:$0xf]
    %v69 = vld [vmem:[%s2 + $0x58] sm:$0xf]
    %v70 = vld [vmem:[%s2 + $0x5c] sm:$0xf]
    %v71 = vld [vmem:[%s2 + $0x60] sm:$0xf]
    %v72 = vld [vmem:[%s2 + $0x64] sm:$0xf]
    %v73 = vld [vmem:[%s2 + $0x68] sm:$0xf]
    %v74 = vld [vmem:[%s2 + $0x6c] sm:$0xf]
    %v75 = vld [vmem:[%s2 + $0x70] sm:$0xf]
    %v76 = vld [vmem:[%s2 + $0x74] sm:$0xf]
    %v77 = vld [vmem:[%s2 + $0x78] sm:$0xf]
    %v78 = vld [vmem:[%s2 + $0x7c] sm:$0xf]
    %v79 = vld [vmem:[%s2 + $0x80] sm:$0xf]
    %v80 = vld [vmem:[%s2 + $0x84] sm:$0xf]
    %v81 = vld [vmem:[%s2 + $0x88] sm:$0xf]
    %v82 = vld [vmem:[%s2 + $0x8c] sm:$0xf]
    %v83 = vld [vmem:[%s2 + $0x90] sm:$0xf]
    %v84 = vld [vmem:[%s2 + $0x94] sm:$0xf]
    %v85 = vld [vmem:[%s2 + $0x98] sm:$0xf]
    %v86 = vld [vmem:[%s2 + $0x9c] sm:$0xf]
    %v87 = vld [vmem:[%s2 + $0xa0] sm:$0xf]
    %v88 = vld [vmem:[%s2 + $0xa4] sm:$0xf]
    %v89 = vld [vmem:[%s2 + $0xa8] sm:$0xf]
    %v90 = vld [vmem:[%s2 + $0xac] sm:$0xf]
    %v91 = vld [vmem:[%s2 + $0xb0] sm:$0xf]
    %v92 = vld [vmem:[%s2 + $0xb4] sm:$0xf]
    %v93 = vld [vmem:[%s2 + $0xb8] sm:$0xf]
    %v94 = vld [vmem:[%s2 + $0xbc] sm:$0xf]
    %v95 = vld [vmem:[%s2 + $0xc0] sm:$0xf]
    %v96 = vld [vmem:[%s2 + $0xc4] sm:$0xf]
    %v97 = vld [vmem:[%s2 + $0xc8] sm:$0xf]
    %v98 = vld [vmem:[%s2 + $0xcc] sm:$0xf]
    %v99 = vld [vmem:[%s2 + $0xd0] sm:$0xf]
    %v100 = vld [vmem:[%s2 + $0xd4] sm:$0xf]
    %v101 = vld [vmem:[%s2 + $0xd8] sm:$0xf]
    %v102 = vld [vmem:[%s2 + $0xdc] sm:$0xf]
    %v103 = vld [vmem:[%s2 + $0xe0] sm:$0xf]
    %v104 = vld [vmem:[%s2 + $0xe4] sm:$0xf]
    %v105 = vld [vmem:[%s2 + $0xe8] sm:$0xf]
    %v106 = vld [vmem:[%s2 + $0xec] sm:$0xf]
    %v107 = vld [vmem:[%s2 + $0xf0] sm:$0xf]
    %v108 = vld [vmem:[%s2 + $0xf4] sm:$0xf]
    %v109 = vld [vmem:[%s2 + $0xf8] sm:$0xf]
    %v110 = vld [vmem:[%s2 + $0xfc] sm:$0xf]
    %v111 = vld [vmem:[%s3] sm:$0x1]
    %v113 = vlaneseq
    %v114 = vshrl.u32 %v113, 7
    %v115 = vsub.s32 0, %v114
    %v116 = vrot.slane %v111, %v115
    %v182 = vunpack.c.l.b16 %v47
    %v183 = vunpack.c.l.b16 %v48
    %v184 = vunpack.c.l.b16 %v49
    %v185 = vunpack.c.l.b16 %v50
    %v186 = vunpack.c.l.b16 %v51
    %v187 = vunpack.c.l.b16 %v52
    %v188 = vunpack.c.l.b16 %v53
    %v189 = vunpack.c.l.b16 %v54
    %v190 = vunpack.c.l.b16 %v55
    %v191 = vunpack.c.l.b16 %v56
    %v192 = vunpack.c.l.b16 %v57
    %v193 = vunpack.c.l.b16 %v58
    %v194 = vunpack.c.l.b16 %v59
    %v195 = vunpack.c.l.b16 %v60
    %v196 = vunpack.c.l.b16 %v61
    %v197 = vunpack.c.l.b16 %v62
    %v198 = vunpack.c.l.b16 %v63
    %v199 = vunpack.c.l.b16 %v64
    %v200 = vunpack.c.l.b16 %v65
    %v201 = vunpack.c.l.b16 %v66
    %v202 = vunpack.c.l.b16 %v67
    %v203 = vunpack.c.l.b16 %v68
    %v204 = vunpack.c.l.b16 %v69
    %v205 = vunpack.c.l.b16 %v70
    %v206 = vunpack.c.l.b16 %v71
    %v207 = vunpack.c.l.b16 %v72
    %v208 = vunpack.c.l.b16 %v73
    %v209 = vunpack.c.l.b16 %v74
    %v210 = vunpack.c.l.b16 %v75
    %v211 = vunpack.c.l.b16 %v76
    %v212 = vunpack.c.l.b16 %v77
    %v213 = vunpack.c.l.b16 %v78
    %v214 = vunpack.c.l.b16 %v79
    %v215 = vunpack.c.l.b16 %v80
    %v216 = vunpack.c.l.b16 %v81
    %v217 = vunpack.c.l.b16 %v82
    %v218 = vunpack.c.l.b16 %v83
    %v219 = vunpack.c.l.b16 %v84
    %v220 = vunpack.c.l.b16 %v85
    %v221 = vunpack.c.l.b16 %v86
    %v222 = vunpack.c.l.b16 %v87
    %v223 = vunpack.c.l.b16 %v88
    %v224 = vunpack.c.l.b16 %v89
    %v225 = vunpack.c.l.b16 %v90
    %v226 = vunpack.c.l.b16 %v91
    %v227 = vunpack.c.l.b16 %v92
    %v228 = vunpack.c.l.b16 %v93
    %v229 = vunpack.c.l.b16 %v94
    %v230 = vunpack.c.l.b16 %v95
    %v231 = vunpack.c.l.b16 %v96
    %v232 = vunpack.c.l.b16 %v97
    %v233 = vunpack.c.l.b16 %v98
    %v234 = vunpack.c.l.b16 %v99
    %v235 = vunpack.c.l.b16 %v100
    %v236 = vunpack.c.l.b16 %v101
    %v237 = vunpack.c.l.b16 %v102
    %v238 = vunpack.c.l.b16 %v103
    %v239 = vunpack.c.l.b16 %v104
    %v240 = vunpack.c.l.b16 %v105
    %v241 = vunpack.c.l.b16 %v106
    %v242 = vunpack.c.l.b16 %v107
    %v243 = vunpack.c.l.b16 %v108
    %v244 = vunpack.c.l.b16 %v109
    %v245 = vunpack.c.l.b16 %v110
    %v246 = vpack.c.b16 %v183, %v182
    %v247 = vpack.c.b16 %v185, %v184
    %v248 = vpack.c.b16 %v187, %v186
    %v249 = vpack.c.b16 %v189, %v188
    %v250 = vpack.c.b16 %v191, %v190
    %v251 = vpack.c.b16 %v193, %v192
    %v252 = vpack.c.b16 %v195, %v194
    %v253 = vpack.c.b16 %v197, %v196
    %v254 = vpack.c.b16 %v199, %v198
    %v255 = vpack.c.b16 %v201, %v200
    %v256 = vpack.c.b16 %v203, %v202
    %v257 = vpack.c.b16 %v205, %v204
    %v258 = vpack.c.b16 %v207, %v206
    %v259 = vpack.c.b16 %v209, %v208
    %v260 = vpack.c.b16 %v211, %v210
    %v261 = vpack.c.b16 %v213, %v212
    %v262 = vpack.c.b16 %v215, %v214
    %v263 = vpack.c.b16 %v217, %v216
    %v264 = vpack.c.b16 %v219, %v218
    %v265 = vpack.c.b16 %v221, %v220
    %v266 = vpack.c.b16 %v223, %v222
    %v267 = vpack.c.b16 %v225, %v224
    %v268 = vpack.c.b16 %v227, %v226
    %v269 = vpack.c.b16 %v229, %v228
    %v270 = vpack.c.b16 %v231, %v230
    %v271 = vpack.c.b16 %v233, %v232
    %v272 = vpack.c.b16 %v235, %v234
    %v273 = vpack.c.b16 %v237, %v236
    %v274 = vpack.c.b16 %v239, %v238
    %v275 = vpack.c.b16 %v241, %v240
    %v276 = vpack.c.b16 %v243, %v242
    %v277 = vpack.c.b16 %v245, %v244
    %310 = vmatprep.subr.bf16.mxu0 0
    %311 = vmatpush1.bf16.msra.mxu0 %v246
    %312 = vmatprep.subr.bf16.mxu0 0
    %313 = vmatpush1.bf16.msra.mxu0 %v247
    %314 = vmatprep.subr.bf16.mxu0 0
    %315 = vmatpush1.bf16.msra.mxu0 %v248
    %316 = vmatprep.subr.bf16.mxu0 0
    %317 = vmatpush1.bf16.msra.mxu0 %v249
    %318 = vmatprep.subr.bf16.mxu0 0
    %319 = vmatpush1.bf16.msra.mxu0 %v250
    %320 = vmatprep.subr.bf16.mxu0 0
    %321 = vmatpush1.bf16.msra.mxu0 %v251
    %322 = vmatprep.subr.bf16.mxu0 0
    %323 = vmatpush1.bf16.msra.mxu0 %v252
    %324 = vmatprep.subr.bf16.mxu0 0
    %325 = vmatpush1.bf16.msra.mxu0 %v253
    %326 = vmatprep.subr.bf16.mxu0 0
    %327 = vmatpush1.bf16.msra.mxu0 %v254
    %328 = vmatprep.subr.bf16.mxu0 0
    %329 = vmatpush1.bf16.msra.mxu0 %v255
    %330 = vmatprep.subr.bf16.mxu0 0
    %331 = vmatpush1.bf16.msra.mxu0 %v256
    %332 = vmatprep.subr.bf16.mxu0 0
    %333 = vmatpush1.bf16.msra.mxu0 %v257
    %334 = vmatprep.subr.bf16.mxu0 0
    %335 = vmatpush1.bf16.msra.mxu0 %v258
    %336 = vmatprep.subr.bf16.mxu0 0
    %337 = vmatpush1.bf16.msra.mxu0 %v259
    %338 = vmatprep.subr.bf16.mxu0 0
    %339 = vmatpush1.bf16.msra.mxu0 %v260
    %340 = vmatprep.subr.bf16.mxu0 0
    %341 = vmatpush1.bf16.msra.mxu0 %v261
    %342 = vmatprep.mubr.bf16.mxu0 %v44
    %343 = vmatmul.mubr.bf16.gmra.mrb[0].mxu0 %v43
    %v344 = vpop.f32.mrb[0].mxu0
    %v345 = vadd.f32 %v116, %v344
    %v346 = vpop.f32.mrb[0].mxu0
    %v347 = vpop.f32.mrb[0].mxu0
    %v348 = vadd.f32 %v116, %v347
    %v349 = vpop.f32.mrb[0].mxu0
    %350 = vdwg.mxu0
    %351 = vmatprep.subr.bf16.mxu0 0
    %352 = vmatpush1.bf16.msra.mxu0 %v262
    %353 = vmatprep.subr.bf16.mxu0 0
    %354 = vmatpush1.bf16.msra.mxu0 %v263
    %355 = vmatprep.subr.bf16.mxu0 0
    %356 = vmatpush1.bf16.msra.mxu0 %v264
    %357 = vmatprep.subr.bf16.mxu0 0
    %358 = vmatpush1.bf16.msra.mxu0 %v265
    %359 = vmatprep.subr.bf16.mxu0 0
    %360 = vmatpush1.bf16.msra.mxu0 %v266
    %361 = vmatprep.subr.bf16.mxu0 0
    %362 = vmatpush1.bf16.msra.mxu0 %v267
    %363 = vmatprep.subr.bf16.mxu0 0
    %364 = vmatpush1.bf16.msra.mxu0 %v268
    %365 = vmatprep.subr.bf16.mxu0 0
    %366 = vmatpush1.bf16.msra.mxu0 %v269
    %367 = vmatprep.subr.bf16.mxu0 0
    %368 = vmatpush1.bf16.msra.mxu0 %v270
    %369 = vmatprep.subr.bf16.mxu0 0
    %370 = vmatpush1.bf16.msra.mxu0 %v271
    %371 = vmatprep.subr.bf16.mxu0 0
    %372 = vmatpush1.bf16.msra.mxu0 %v272
    %373 = vmatprep.subr.bf16.mxu0 0
    %374 = vmatpush1.bf16.msra.mxu0 %v273
    %375 = vmatprep.subr.bf16.mxu0 0
    %376 = vmatpush1.bf16.msra.mxu0 %v274
    %377 = vmatprep.subr.bf16.mxu0 0
    %378 = vmatpush1.bf16.msra.mxu0 %v275
    %379 = vmatprep.subr.bf16.mxu0 0
    %380 = vmatpush1.bf16.msra.mxu0 %v276
    %381 = vmatprep.subr.bf16.mxu0 0
    %382 = vmatpush1.bf16.msra.mxu0 %v277
    %383 = vmatprep.mubr.bf16.mxu0 %v46
    %384 = vmatmul.mubr.bf16.gmra.mrb[0].mxu0 %v45
    %v385 = vpop.f32.mrb[0].mxu0
    %v386 = vadd.f32 %v345, %v385
    %v387 = vpop.f32.mrb[0].mxu0
    %v388 = vpop.f32.mrb[0].mxu0
    %v389 = vadd.f32 %v348, %v388
    %v390 = vpop.f32.mrb[0].mxu0
    %391 = vdwg.mxu0
    %392 = vst [vmem:[#allocation2] sm:$0xff] %v386
    %393 = vst [vmem:[#allocation2 + $0x8] sm:$0xff] %v389
    // Predicated region
    $region18: #{linear_eval_forward.1} parent=1 // pred_check
      _
    $region19: #{linear_eval_forward.1} parent=1 // pred_check_branch
      %395 = sbr.rel (0) target = $region21
    $region20: #{linear_eval_forward.1} parent=1 // pred_region
      %s397 = ssub.s32 256, 256
      %398 = vsyncadd [#allocation3], %s397
      %s399 = sshll.u32 [#allocation2], 4
      %s400 = int_to_ptr.vmem [resolvable:$true] %s399
      %405 = dma.vmem_to_hbm [thread:$0]  %s400, 256, %s4, [#allocation3], 128, 128, 8
    $region21: #{linear_eval_forward.1} parent=1 // pred_fallthru
      _
    // Predicated region
    $region22: #{linear_eval_forward.1} parent=1 // pred_check
      _
    $region23: #{linear_eval_forward.1} parent=1 // pred_check_branch
      %407 = sbr.rel (0) target = $region25
    $region24: #{linear_eval_forward.1} parent=1 // pred_region
      %408 = dma.done [#allocation3], 256
    $region25: #{linear_eval_forward.1} parent=1 // pred_fallthru
      _
    %409 = vsyncpa [#allocation3], 1

</llo_original>
